<compile_context>
chip_gen: v6e
topology: v6e:2x2x1
jax: 0.10.0
libtpu: 0.0.40
codegen_flags: <defaults>
</compile_context>

<pallas_src>
import math

import jax
import jax.numpy as jnp
from jax.experimental import pallas as pl
from jax.experimental.pallas import tpu as pltpu


# ---------------------------------------------------------------------------
# Helpers
# ---------------------------------------------------------------------------

def _round_up(x, m=128):
    return ((x + m - 1) // m) * m


def _vmem_capacity_bytes():
    """Physical VMEM per core; falls back to the v7x floor (64 MiB)."""
    try:
        info = pltpu.get_tpu_info()
        for name in ("vmem_capacity_bytes", "vmem_size_bytes", "vmem_bytes"):
            v = getattr(info, name, None)
            if v:
                return int(v)
    except Exception:
        pass
    return 64 * 1024 * 1024


def _pick_group_size(B, N, target_rows=256):
    """Graphs per grid step: aim for G*N ~ 256 MXU rows.

    256 rows fills the v6e/v7x 256-wide MXU (two passes of the v5e 128-wide
    MXU).  No ">= 2 grid steps" constraint: on single-TC chips the grid is a
    serial loop, so fewer/larger steps are strictly better.  The batch is
    zero-padded to a multiple of G outside the kernel, so there is no
    divisibility fallback to G=1.
    """
    return max(1, min(B, target_rows // max(N, 1)))


# ---------------------------------------------------------------------------
# Fused kernel: normalization + block-diag assembly + init transform + stack
# ---------------------------------------------------------------------------

def _make_fused_kernel(n_layers, G, N):
    GN = G * N

    def kernel(*refs):
        adj_ref, x_ref, w0_ref = refs[0], refs[1], refs[2]
        layer_refs = refs[3:3 + 2 * n_layers]
        out_ref = refs[3 + 2 * n_layers]

        # --- A_hat = D^-1/2 (A + I) D^-1/2 per graph (no eye constant) ------
        a = adj_ref[...].astype(jnp.float32)                     # (G, N, N)
        rr = jax.lax.broadcasted_iota(jnp.int32, (N, N), 0)
        cc = jax.lax.broadcasted_iota(jnp.int32, (N, N), 1)
        a = a + (rr == cc).astype(jnp.float32)[None]             # + I via iota mask
        dinv = jax.lax.rsqrt(a.sum(axis=-1))                     # EUP; deg >= 1 after +I
        # a_bd below is built ONCE and reused by every layer, so scaling the
        # (N,N) blocks here (O(G*N^2), once) amortizes better than rescaling
        # XW by dinv inside the per-layer loop.
        a_hat = a * dinv[:, :, None] * dinv[:, None, :]          # (G, N, N) f32

        # --- assemble ONE dense block-diagonal (GN, GN) aggregation operand:
        #     each layer then does a single big MXU push instead of G tiny
        #     (N,N)@(N,F) matmuls. Built with static concats only (no vector
        #     integer division, no gathers). --------------------------------
        if G == 1:
            a_bd = a_hat.reshape(N, N)
        else:
            col_blocks = []
            for g in range(G):
                parts = []
                if g > 0:
                    parts.append(jnp.zeros((g * N, N), jnp.float32))
                parts.append(a_hat[g])
                if g < G - 1:
                    parts.append(jnp.zeros(((G - 1 - g) * N, N), jnp.float32))
                col_blocks.append(parts[0] if len(parts) == 1
                                  else jnp.concatenate(parts, axis=0))
            a_bd = jnp.concatenate(col_blocks, axis=1)           # (GN, GN)
        a_bd = a_bd.astype(jnp.bfloat16)

        # --- init transform: one (GN, Fin) @ (Fin, Dp) MXU push -------------
        x = x_ref[...]                                           # bf16 (G, N, Fin)
        h = jnp.dot(x.reshape(GN, x.shape[-1]), w0_ref[...],
                    preferred_element_type=jnp.float32)          # (GN, Dp) f32

        # --- GCN stack, unrolled; h stays resident in VMEM across layers ----
        for li in range(n_layers):
            w = layer_refs[2 * li][...]                          # bf16 (Din_p, Dout_p)
            b = layer_refs[2 * li + 1][...]                      # f32  (1, Dout_p)
            xw = jnp.dot(h.astype(jnp.bfloat16), w,
                         preferred_element_type=jnp.float32)     # (GN, Dout_p)
            ax = jnp.dot(a_bd, xw.astype(jnp.bfloat16),
                         preferred_element_type=jnp.float32)     # block-diag agg
            h = jnp.maximum(ax + b, 0.0)                         # f32 epilogue

        # Lane-dense bf16 store (half the writeback of padded f32).
        out_ref[...] = h.reshape(G, N, -1).astype(out_ref.dtype)

    return kernel


# ---------------------------------------------------------------------------
# MolecularGCN (parameters + forward glue)
# ---------------------------------------------------------------------------

class MolecularGCNPallas:
    def __init__(self, in_feats, dim_embedding=128, padding=True,
                 hidden_feats=(64, 64), key=None):
        if key is None:
            key = jax.random.PRNGKey(0)
        hidden_feats = tuple(hidden_feats)
        n_layers = len(hidden_feats)
        keys = jax.random.split(key, 1 + 2 * n_layers)

        self.in_feats = in_feats
        self.dim_embedding = dim_embedding
        self.hidden_feats = hidden_feats
        self.output_feats = hidden_feats[-1]

        D = dim_embedding
        Dp = _round_up(D)

        # init_transform: PyTorch Linear weight is (dim_embedding, in_feats);
        # stored as W^T (in_feats, dim_embedding). weight[-1].fill_(0) zeros
        # the LAST OUTPUT feature -> last logical column.
        s0 = 1.0 / math.sqrt(in_feats)
        w0 = jax.random.uniform(keys[0], (in_feats, D), jnp.float32, -s0, s0)
        if padding:
            w0 = w0.at[:, -1].set(0.0)
        w0p = jnp.zeros((in_feats, Dp), jnp.float32).at[:, :D].set(w0)
        self.w0 = w0p.astype(jnp.bfloat16)

        # GCN layer weights/biases, zero-padded to 128-multiple feature dims
        # (padded rows/cols are exactly zero -> padded channels stay zero).
        self.layer_params = []
        fin, fin_p = D, Dp
        for li, fout in enumerate(hidden_feats):
            fout_p = _round_up(fout)
            s = 1.0 / math.sqrt(fin)
            w = jax.random.uniform(keys[1 + 2 * li], (fin, fout),
                                   jnp.float32, -s, s)
            b = jax.random.uniform(keys[2 + 2 * li], (fout,),
                                   jnp.float32, -s, s)
            wp = jnp.zeros((fin_p, fout_p), jnp.float32).at[:fin, :fout].set(w)
            bp = jnp.zeros((1, fout_p), jnp.float32).at[0, :fout].set(b)
            self.layer_params.append((wp.astype(jnp.bfloat16), bp))
            fin, fin_p = fout, fout_p
        self._padded_out = fin_p

    def __call__(self, adj, node_feats):
        """adj: (B, N, N) dense 0/1 adjacency; node_feats: (B, N, in_feats)."""
        B, N, Fin = node_feats.shape
        assert adj.shape == (B, N, N)
        n_layers = len(self.layer_params)
        G = _pick_group_size(B, N)
        DpL = self._padded_out
        GN = G * N

        # int8 adjacency: halves the O(N^2) HBM->VMEM stream vs bf16.
        adj_i8 = adj.astype(jnp.int8)
        x_bf16 = node_feats.astype(jnp.bfloat16)

        # Pad the batch to a multiple of G (padded graphs are all-zero:
        # A_hat = I, features 0 -> harmless rows that are sliced off below).
        Bp = ((B + G - 1) // G) * G
        if Bp != B:
            adj_i8 = jnp.pad(adj_i8, ((0, Bp - B), (0, 0), (0, 0)))
            x_bf16 = jnp.pad(x_bf16, ((0, Bp - B), (0, 0), (0, 0)))

        in_specs = [
            pl.BlockSpec((G, N, N), lambda g: (g, 0, 0)),
            pl.BlockSpec((G, N, Fin), lambda g: (g, 0, 0)),
            # TODO(synk): loop-invariant weight/bias blocks would ideally be
            # single-buffered (pl.Buffered(1)); default double-buffering kept
            # for lowering safety and accounted for in the VMEM estimate.
            pl.BlockSpec(self.w0.shape, lambda g: (0, 0)),
        ]
        args = [adj_i8, x_bf16, self.w0]
        for w, b in self.layer_params:
            in_specs.append(pl.BlockSpec(w.shape, lambda g: (0, 0)))
            in_specs.append(pl.BlockSpec(b.shape, lambda g: (0, 0)))
            args += [w, b]

        # Per-generation VMEM budget: ~80% of physical VMEM (≈51 MiB on v7x,
        # ≈102 MiB on v5e/v6e) so the compiler keeps scratch/semaphore room;
        # in-kernel f32 temporaries are counted in the estimate.
        param_bytes = sum(int(a.size) * a.dtype.itemsize for a in args[2:])
        block_bytes = (G * N * N * 1            # adj int8
                       + G * N * Fin * 2        # x bf16
                       + G * N * DpL * 2)       # out bf16
        temp_bytes = (G * N * N * 4             # A + I (f32)
                      + GN * GN * (4 + 2)       # block-diag A_hat f32 + bf16
                      + 3 * GN * DpL * 4)       # h / xw / ax f32
        vmem_est = 2 * param_bytes + 2 * block_bytes + temp_bytes
        vmem_cap = int(0.8 * _vmem_capacity_bytes())
        vmem_limit = int(min(vmem_cap, max(32 * 1024 * 1024, 2 * vmem_est)))

        kernel = _make_fused_kernel(n_layers, G, N)
        out = pl.pallas_call(
            kernel,
            out_shape=jax.ShapeDtypeStruct((Bp, N, DpL), jnp.bfloat16),
            grid_spec=pltpu.PrefetchScalarGridSpec(
                num_scalar_prefetch=0,
                grid=(Bp // G,),
                in_specs=in_specs,
                out_specs=pl.BlockSpec((G, N, DpL), lambda g: (g, 0, 0)),
            ),
            # TODO(synk): on v7x an explicit CORE_PARALLEL leading grid axis
            # (size 2) would pin both TensorCores; plain "parallel" is kept
            # for portability across v5e/v6e/v7x.
            compiler_params=pltpu.CompilerParams(
                dimension_semantics=("parallel",),
                vmem_limit_bytes=vmem_limit,
            ),
        )(*args)

        # Drop batch/lane padding; .view(batch_size, -1, output_feats).
        out = out[:B, :, :self.output_feats].astype(jnp.float32)
        return out.reshape(B, -1, self.output_feats)


# ---------------------------------------------------------------------------
# Pure-JAX reference (same bf16 weights, f32 math) for a sanity check
# ---------------------------------------------------------------------------

def _reference_forward(model, adj, node_feats):
    B, N, _ = node_feats.shape
    a = adj.astype(jnp.float32) + jnp.eye(N, dtype=jnp.float32)[None]
    dinv = jax.lax.rsqrt(a.sum(-1))
    a_hat = a * dinv[:, :, None] * dinv[:, None, :]
    D = model.dim_embedding
    x = node_feats.astype(jnp.bfloat16).astype(jnp.float32)
    h = x @ model.w0[:, :D].astype(jnp.float32)
    fin = D
    for (w, b), fout in zip(model.layer_params, model.hidden_feats):
        wf = w[:fin, :fout].astype(jnp.float32)
        bf = b[:, :fout]
        h = jnp.maximum(jnp.einsum('bij,bjf->bif', a_hat, h @ wf) + bf, 0.0)
        fin = fout
    return h


# ---------------------------------------------------------------------------
# Demo
# ---------------------------------------------------------------------------

if __name__ == "__main__":
    key = jax.random.PRNGKey(0)
    k_feat, k_adj, k_param = jax.random.split(key, 3)

    B, N, IN_FEATS = 2, 16, 8
    DIM_EMB = 128
    HIDDEN = (64, 64)

    # Node features.
    node_feats = jax.random.normal(k_feat, (B, N, IN_FEATS), jnp.float32)

    # Random symmetric adjacency without self loops.
    rand = jax.random.uniform(k_adj, (B, N, N))
    upper = (rand > 0.7).astype(jnp.float32)
    adj = jnp.triu(upper, 1)
    adj = adj + jnp.swapaxes(adj, -1, -2)

    model = MolecularGCNPallas(IN_FEATS, dim_embedding=DIM_EMB,
                               padding=True, hidden_feats=HIDDEN, key=k_param)

    out = model(adj, node_feats)
    jax.block_until_ready(out)
    assert out.shape == (B, N, HIDDEN[-1])

    ref = _reference_forward(model, adj, node_feats)
    err = float(jnp.max(jnp.abs(out - ref)))
    assert err < 5e-2, f"max abs err {err}"
    print("KERNEL_OK")
</pallas_src>

<mosaic_0001>
module attributes {stable_mosaic.version = 11 : i64} {
  func.func @kernel(%arg0: i32, %arg1: memref<2x16x16xi8, #tpu.memory_space<vmem>>, %arg2: memref<2x16x8xbf16, #tpu.memory_space<vmem>>, %arg3: memref<8x128xbf16, #tpu.memory_space<vmem>>, %arg4: memref<128x128xbf16, #tpu.memory_space<vmem>>, %arg5: memref<1x128xf32, #tpu.memory_space<vmem>>, %arg6: memref<128x128xbf16, #tpu.memory_space<vmem>>, %arg7: memref<1x128xf32, #tpu.memory_space<vmem>>, %arg8: memref<2x16x128xbf16, #tpu.memory_space<vmem>>) attributes {dimension_semantics = [#tpu.dimension_semantics<parallel>], iteration_bounds = array<i64: 1>, scalar_prefetch = 0 : i64, scratch_operands = 0 : i64, tpu.core_type = #tpu.core_type<tc>, window_params = [{transform_indices = @transform_0, window_bounds = array<i64: 2, 16, 16>}, {transform_indices = @transform_1, window_bounds = array<i64: 2, 16, 8>}, {pipeline_mode = #tpu.pipeline_mode<synchronous>, transform_indices = @transform_2, window_bounds = array<i64: 8, 128>}, {pipeline_mode = #tpu.pipeline_mode<synchronous>, transform_indices = @transform_3, window_bounds = array<i64: 128, 128>}, {pipeline_mode = #tpu.pipeline_mode<synchronous>, transform_indices = @transform_4, window_bounds = array<i64: 1, 128>}, {pipeline_mode = #tpu.pipeline_mode<synchronous>, transform_indices = @transform_5, window_bounds = array<i64: 128, 128>}, {pipeline_mode = #tpu.pipeline_mode<synchronous>, transform_indices = @transform_6, window_bounds = array<i64: 1, 128>}, {transform_indices = @transform_7, window_bounds = array<i64: 2, 16, 128>}]} {
    %c0 = arith.constant 0 : index
    %c0_0 = arith.constant 0 : index
    %c0_1 = arith.constant 0 : index
    %0 = vector.load %arg1[%c0, %c0_0, %c0_1] : memref<2x16x16xi8, #tpu.memory_space<vmem>>, vector<2x16x16xi8>
    %1 = arith.sitofp %0 : vector<2x16x16xi8> to vector<2x16x16xf32>
    %2 = tpu.iota {dimensions = array<i32: 0>} : vector<16x16xi32>
    %3 = tpu.iota {dimensions = array<i32: 1>} : vector<16x16xi32>
    %4 = arith.cmpi eq, %2, %3 : vector<16x16xi32>
    %5 = arith.extui %4 : vector<16x16xi1> to vector<16x16xi32>
    %6 = arith.sitofp %5 : vector<16x16xi32> to vector<16x16xf32>
    %7 = vector.shape_cast %6 : vector<16x16xf32> to vector<1x16x16xf32>
    %8 = vector.broadcast %7 : vector<1x16x16xf32> to vector<2x16x16xf32>
    %9 = arith.addf %1, %8 : vector<2x16x16xf32>
    %cst = arith.constant dense<0.000000e+00> : vector<2x16xf32>
    %10 = vector.multi_reduction <add>, %9, %cst [2] : vector<2x16x16xf32> to vector<2x16xf32>
    %11 = math.rsqrt %10 : vector<2x16xf32>
    %12 = vector.shape_cast %11 : vector<2x16xf32> to vector<2x16x1xf32>
    %13 = vector.broadcast %12 : vector<2x16x1xf32> to vector<2x16x16xf32>
    %14 = arith.mulf %9, %13 : vector<2x16x16xf32>
    %15 = vector.shape_cast %11 : vector<2x16xf32> to vector<2x1x16xf32>
    %16 = vector.broadcast %15 : vector<2x1x16xf32> to vector<2x16x16xf32>
    %17 = arith.mulf %14, %16 : vector<2x16x16xf32>
    %18 = vector.extract_strided_slice %17 {offsets = [0, 0, 0], sizes = [1, 16, 16], strides = [1, 1, 1]} : vector<2x16x16xf32> to vector<1x16x16xf32>
    %19 = vector.shape_cast %18 : vector<1x16x16xf32> to vector<16x16xf32>
    %cst_2 = arith.constant 0.000000e+00 : f32
    %20 = vector.broadcast %cst_2 : f32 to vector<16x16xf32>
    %21 = tpu.concatenate %19, %20 in 0 : vector<16x16xf32>, vector<16x16xf32> -> vector<32x16xf32>
    %cst_3 = arith.constant 0.000000e+00 : f32
    %22 = vector.broadcast %cst_3 : f32 to vector<16x16xf32>
    %23 = vector.extract_strided_slice %17 {offsets = [1, 0, 0], sizes = [1, 16, 16], strides = [1, 1, 1]} : vector<2x16x16xf32> to vector<1x16x16xf32>
    %24 = vector.shape_cast %23 : vector<1x16x16xf32> to vector<16x16xf32>
    %25 = tpu.concatenate %22, %24 in 0 : vector<16x16xf32>, vector<16x16xf32> -> vector<32x16xf32>
    %26 = tpu.concatenate %21, %25 in 1 : vector<32x16xf32>, vector<32x16xf32> -> vector<32x32xf32>
    %27 = arith.truncf %26 : vector<32x32xf32> to vector<32x32xbf16>
    %c0_4 = arith.constant 0 : index
    %c0_5 = arith.constant 0 : index
    %c0_6 = arith.constant 0 : index
    %28 = vector.load %arg2[%c0_4, %c0_5, %c0_6] : memref<2x16x8xbf16, #tpu.memory_space<vmem>>, vector<2x16x8xbf16>
    %29 = vector.shape_cast %28 : vector<2x16x8xbf16> to vector<32x8xbf16>
    %c0_7 = arith.constant 0 : index
    %c0_8 = arith.constant 0 : index
    %30 = vector.load %arg3[%c0_7, %c0_8] : memref<8x128xbf16, #tpu.memory_space<vmem>>, vector<8x128xbf16>
    %cst_9 = arith.constant dense<0.000000e+00> : vector<32x128xf32>
    %31 = tpu.matmul %29, %30, %cst_9 {dimension_numbers = #tpu.dot_dimension_numbers<[1], [0], [0], [1], [0, 0, 1, 1], [], []>} : vector<32x8xbf16>, vector<8x128xbf16>, vector<32x128xf32> -> vector<32x128xf32>
    %c0_10 = arith.constant 0 : index
    %c0_11 = arith.constant 0 : index
    %32 = vector.load %arg4[%c0_10, %c0_11] : memref<128x128xbf16, #tpu.memory_space<vmem>>, vector<128x128xbf16>
    %c0_12 = arith.constant 0 : index
    %c0_13 = arith.constant 0 : index
    %33 = vector.load %arg5[%c0_12, %c0_13] : memref<1x128xf32, #tpu.memory_space<vmem>>, vector<1x128xf32>
    %34 = arith.truncf %31 : vector<32x128xf32> to vector<32x128xbf16>
    %cst_14 = arith.constant dense<0.000000e+00> : vector<32x128xf32>
    %35 = tpu.matmul %34, %32, %cst_14 {dimension_numbers = #tpu.dot_dimension_numbers<[1], [0], [0], [1], [0, 0, 1, 1], [], []>} : vector<32x128xbf16>, vector<128x128xbf16>, vector<32x128xf32> -> vector<32x128xf32>
    %36 = arith.truncf %35 : vector<32x128xf32> to vector<32x128xbf16>
    %cst_15 = arith.constant dense<0.000000e+00> : vector<32x128xf32>
    %37 = tpu.matmul %27, %36, %cst_15 {dimension_numbers = #tpu.dot_dimension_numbers<[1], [0], [0], [1], [0, 0, 1, 1], [], []>} : vector<32x32xbf16>, vector<32x128xbf16>, vector<32x128xf32> -> vector<32x128xf32>
    %38 = vector.broadcast %33 : vector<1x128xf32> to vector<32x128xf32>
    %39 = arith.addf %37, %38 : vector<32x128xf32>
    %cst_16 = arith.constant 0.000000e+00 : f32
    %40 = vector.broadcast %cst_16 : f32 to vector<32x128xf32>
    %41 = arith.maximumf %39, %40 : vector<32x128xf32>
    %c0_17 = arith.constant 0 : index
    %c0_18 = arith.constant 0 : index
    %42 = vector.load %arg6[%c0_17, %c0_18] : memref<128x128xbf16, #tpu.memory_space<vmem>>, vector<128x128xbf16>
    %c0_19 = arith.constant 0 : index
    %c0_20 = arith.constant 0 : index
    %43 = vector.load %arg7[%c0_19, %c0_20] : memref<1x128xf32, #tpu.memory_space<vmem>>, vector<1x128xf32>
    %44 = arith.truncf %41 : vector<32x128xf32> to vector<32x128xbf16>
    %cst_21 = arith.constant dense<0.000000e+00> : vector<32x128xf32>
    %45 = tpu.matmul %44, %42, %cst_21 {dimension_numbers = #tpu.dot_dimension_numbers<[1], [0], [0], [1], [0, 0, 1, 1], [], []>} : vector<32x128xbf16>, vector<128x128xbf16>, vector<32x128xf32> -> vector<32x128xf32>
    %46 = arith.truncf %45 : vector<32x128xf32> to vector<32x128xbf16>
    %cst_22 = arith.constant dense<0.000000e+00> : vector<32x128xf32>
    %47 = tpu.matmul %27, %46, %cst_22 {dimension_numbers = #tpu.dot_dimension_numbers<[1], [0], [0], [1], [0, 0, 1, 1], [], []>} : vector<32x32xbf16>, vector<32x128xbf16>, vector<32x128xf32> -> vector<32x128xf32>
    %48 = vector.broadcast %43 : vector<1x128xf32> to vector<32x128xf32>
    %49 = arith.addf %47, %48 : vector<32x128xf32>
    %cst_23 = arith.constant 0.000000e+00 : f32
    %50 = vector.broadcast %cst_23 : f32 to vector<32x128xf32>
    %51 = arith.maximumf %49, %50 : vector<32x128xf32>
    %52 = vector.shape_cast %51 : vector<32x128xf32> to vector<2x16x128xf32>
    %53 = arith.truncf %52 : vector<2x16x128xf32> to vector<2x16x128xbf16>
    %c0_24 = arith.constant 0 : index
    %c0_25 = arith.constant 0 : index
    %c0_26 = arith.constant 0 : index
    %54 = vector.load %arg8[%c0_24, %c0_25, %c0_26] : memref<2x16x128xbf16, #tpu.memory_space<vmem>>, vector<2x16x128xbf16>
    tpu.vector_store %arg8[%c0_24, %c0_25, %c0_26], %53 {strides = array<i32>} : memref<2x16x128xbf16, #tpu.memory_space<vmem>>, vector<2x16x128xbf16>,
    return
  }
  func.func @transform_0(%arg0: i32) -> (i32, i32, i32) {
    %c0_i32 = arith.constant 0 : i32
    %c0_i32_0 = arith.constant 0 : i32
    %c0_i32_1 = arith.constant 0 : i32
    return %arg0, %c0_i32, %c0_i32_0 : i32, i32, i32
  }
  func.func @transform_1(%arg0: i32) -> (i32, i32, i32) {
    %c0_i32 = arith.constant 0 : i32
    %c0_i32_0 = arith.constant 0 : i32
    %c0_i32_1 = arith.constant 0 : i32
    return %arg0, %c0_i32, %c0_i32_0 : i32, i32, i32
  }
  func.func @transform_2(%arg0: i32) -> (i32, i32) {
    %c0_i32 = arith.constant 0 : i32
    %c0_i32_0 = arith.constant 0 : i32
    %c0_i32_1 = arith.constant 0 : i32
    return %c0_i32, %c0_i32_0 : i32, i32
  }
  func.func @transform_3(%arg0: i32) -> (i32, i32) {
    %c0_i32 = arith.constant 0 : i32
    %c0_i32_0 = arith.constant 0 : i32
    %c0_i32_1 = arith.constant 0 : i32
    return %c0_i32, %c0_i32_0 : i32, i32
  }
  func.func @transform_4(%arg0: i32) -> (i32, i32) {
    %c0_i32 = arith.constant 0 : i32
    %c0_i32_0 = arith.constant 0 : i32
    %c0_i32_1 = arith.constant 0 : i32
    return %c0_i32, %c0_i32_0 : i32, i32
  }
  func.func @transform_5(%arg0: i32) -> (i32, i32) {
    %c0_i32 = arith.constant 0 : i32
    %c0_i32_0 = arith.constant 0 : i32
    %c0_i32_1 = arith.constant 0 : i32
    return %c0_i32, %c0_i32_0 : i32, i32
  }
  func.func @transform_6(%arg0: i32) -> (i32, i32) {
    %c0_i32 = arith.constant 0 : i32
    %c0_i32_0 = arith.constant 0 : i32
    %c0_i32_1 = arith.constant 0 : i32
    return %c0_i32, %c0_i32_0 : i32, i32
  }
  func.func @transform_7(%arg0: i32) -> (i32, i32, i32) {
    %c0_i32 = arith.constant 0 : i32
    %c0_i32_0 = arith.constant 0 : i32
    %c0_i32_1 = arith.constant 0 : i32
    return %arg0, %c0_i32, %c0_i32_0 : i32, i32, i32
  }
}

</mosaic_0001>

<llo_original>
// kernel: tpu_custom_call.1
$region0: #{tpu_custom_call.1}
  #allocation0 [shape = 'u32[]', space=smem, size = 0x4, offset = 0x4, fixed_abs, tag = 'smem constant byte address 0x4 - core index']
  #allocation1 [shape = 'u32[144,128]{1,0:T(1,128)}', space=vmem, size = 0x12000, scoped, tag = 'internal scratch']
  %s0 = inlined_call_operand.vmem [shape: s8[2,16,16], index: 0, kind: input, shape index: {}]
  %s1 = inlined_call_operand.vmem [shape: bf16[2,16,8], index: 1, kind: input, shape index: {}]
  %s2 = inlined_call_operand.vmem [shape: bf16[8,128], index: 2, kind: input, shape index: {}]
  %s3 = inlined_call_operand.hbm [shape: bf16[128,128], index: 3, kind: input, shape index: {}]
  %s4 = inlined_call_operand.vmem [shape: f32[1,128], index: 4, kind: input, shape index: {}]
  %s5 = inlined_call_operand.hbm [shape: bf16[128,128], index: 5, kind: input, shape index: {}]
  %s6 = inlined_call_operand.vmem [shape: f32[1,128], index: 6, kind: input, shape index: {}]
  %s7 = inlined_call_operand.hbm [shape: bf16[2,16,128], index: 7, kind: output, shape index: {}]
  %s8 = sld [smem:[#allocation0]]
  $region46: #{tpu_custom_call.1} parent=0
    _
  %s10 = ssub.s32 1, %s8
  %s11 = scalar_select 0, %s10, %s8
  $region1: #{tpu_custom_call.1} parent=0
    #allocation2 [shape = 'u8[32768]{0}', space=vmem, size = 0x8000, scoped, tag = 'input window, operand 3, single buffered']
    #allocation3 [shape = 's32[1]{0}', space=sflag, size = 0x4, scoped, tag = 'scoped memory for tpu_custom_call.1']
    #allocation4 [shape = 's32[1]{0}', space=sflag, size = 0x4, scoped, tag = 'scoped memory for tpu_custom_call.1']
    #allocation5 [shape = 'u8[32768]{0}', space=vmem, size = 0x8000, scoped, tag = 'input window, operand 5, single buffered']
    #allocation6 [shape = 's32[1]{0}', space=sflag, size = 0x4, scoped, tag = 'scoped memory for tpu_custom_call.1']
    #allocation7 [shape = 'u8[8192]{0}', space=vmem, size = 0x2000, scoped, tag = 'output window, operand 0, single buffered']
    %12 = vsyncpa [#allocation3], 0
    %13 = vsyncpa [#allocation6], 0
    %14 = vsyncpa [#allocation4], 0
    // Predicated region
    $region2: #{tpu_custom_call.1} parent=1 // pred_check
      _
    $region3: #{tpu_custom_call.1} parent=1 // pred_check_branch
      %16 = sbr.rel (0) target = $region5
    $region4: #{tpu_custom_call.1} parent=1 // pred_region
      _
    $region5: #{tpu_custom_call.1} parent=1 // pred_fallthru
      _
    // Predicated region
    $region6: #{tpu_custom_call.1} parent=1 // pred_check
      _
    $region7: #{tpu_custom_call.1} parent=1 // pred_check_branch
      %18 = sbr.rel (0) target = $region9
    $region8: #{tpu_custom_call.1} parent=1 // pred_region
      _
    $region9: #{tpu_custom_call.1} parent=1 // pred_fallthru
      _
    // Predicated region
    $region10: #{tpu_custom_call.1} parent=1 // pred_check
      _
    $region11: #{tpu_custom_call.1} parent=1 // pred_check_branch
      %20 = sbr.rel (0) target = $region13
    $region12: #{tpu_custom_call.1} parent=1 // pred_region
      _
    $region13: #{tpu_custom_call.1} parent=1 // pred_fallthru
      _
    // Predicated region
    $region14: #{tpu_custom_call.1} parent=1 // pred_check
      _
    $region15: #{tpu_custom_call.1} parent=1 // pred_check_branch
      %22 = sbr.rel (0) target = $region17
    $region16: #{tpu_custom_call.1} parent=1 // pred_region
      %s24 = ssub.s32 1024, 1024
      %25 = vsyncadd [#allocation3], %s24
      %s26 = sshll.u32 [#allocation2], 4
      %s27 = int_to_ptr.vmem [resolvable:$true] %s26
      %32 = dma.hbm_to_vmem [thread:$0]  %s3, 1024, %s27, [#allocation3], 64, 64, 4
    $region17: #{tpu_custom_call.1} parent=1 // pred_fallthru
      _
    // Predicated region
    $region18: #{tpu_custom_call.1} parent=1 // pred_check
      _
    $region19: #{tpu_custom_call.1} parent=1 // pred_check_branch
      %34 = sbr.rel (0) target = $region21
    $region20: #{tpu_custom_call.1} parent=1 // pred_region
      _
    $region21: #{tpu_custom_call.1} parent=1 // pred_fallthru
      _
    // Predicated region
    $region22: #{tpu_custom_call.1} parent=1 // pred_check
      _
    $region23: #{tpu_custom_call.1} parent=1 // pred_check_branch
      %36 = sbr.rel (0) target = $region25
    $region24: #{tpu_custom_call.1} parent=1 // pred_region
      %s38 = ssub.s32 1024, 1024
      %39 = vsyncadd [#allocation6], %s38
      %s40 = sshll.u32 [#allocation5], 4
      %s41 = int_to_ptr.vmem [resolvable:$true] %s40
      %46 = dma.hbm_to_vmem [thread:$0]  %s5, 1024, %s41, [#allocation6], 64, 64, 4
    $region25: #{tpu_custom_call.1} parent=1 // pred_fallthru
      _
    // Predicated region
    $region26: #{tpu_custom_call.1} parent=1 // pred_check
      _
    $region27: #{tpu_custom_call.1} parent=1 // pred_check_branch
      %48 = sbr.rel (0) target = $region29
    $region28: #{tpu_custom_call.1} parent=1 // pred_region
      _
    $region29: #{tpu_custom_call.1} parent=1 // pred_fallthru
      _
    // Predicated region
    $region30: #{tpu_custom_call.1} parent=1 // pred_check
      _
    $region31: #{tpu_custom_call.1} parent=1 // pred_check_branch
      %50 = sbr.rel (0) target = $region33
    $region32: #{tpu_custom_call.1} parent=1 // pred_region
      %51 = dma.done [#allocation3], 1024
    $region33: #{tpu_custom_call.1} parent=1 // pred_fallthru
      _
    // Predicated region
    $region34: #{tpu_custom_call.1} parent=1 // pred_check
      _
    $region35: #{tpu_custom_call.1} parent=1 // pred_check_branch
      %53 = sbr.rel (0) target = $region37
    $region36: #{tpu_custom_call.1} parent=1 // pred_region
      %54 = dma.done [#allocation6], 1024
    $region37: #{tpu_custom_call.1} parent=1 // pred_fallthru
      _
    %v56 = vld [vmem:[%s0] sm:$0x3]
    %v57 = vld [vmem:[%s0 + $0x2] sm:$0x3]
    %v58 = vld [vmem:[%s0 + $0x4] sm:$0x3]
    %v59 = vld [vmem:[%s0 + $0x6] sm:$0x3]
    %v60 = vunpack.c.0.s8 %v56
    %v61 = vunpack.c.0.s8 %v57
    %v62 = vunpack.c.0.s8 %v58
    %v63 = vunpack.c.0.s8 %v59
    %v64 = vcvt.s32.f32 %v60
    %v65 = vcvt.s32.f32 %v61
    %v66 = vcvt.s32.f32 %v62
    %v67 = vcvt.s32.f32 %v63
    %v68 = vlaneseq
    %v69 = vshrl.u32 %v68, 7
    %v70 = vadd.s32 %v69, 8
    %v71 = vlaneseq
    %v72 = vand.u32 %v71, 127
    %vm73 = vcmp.eq.s32.totalorder %v69, %v72
    %vm74 = vcmp.eq.s32.totalorder %v70, %v72
    %v75 = vsel %vm73, 1, 0
    %v76 = vsel %vm74, 1, 0
    %v77 = vcvt.s32.f32 %v75
    %v78 = vcvt.s32.f32 %v76
    %v79 = vadd.f32 %v64, %v77
    %v80 = vadd.f32 %v65, %v78
    %v81 = vadd.f32 %v66, %v77
    %v82 = vadd.f32 %v67, %v78
    %vm83 = vcmask 130048
    %v84 = vsel %vm83, %v79, 0.0
    %85 = vadd.xlane.f32.xlu0 %v84
    %v86 = vpop.xlane.xlu0 %85
    %v87 = vsel %vm83, %v80, 0.0
    %88 = vadd.xlane.f32.xlu0 %v87
    %v89 = vpop.xlane.xlu0 %88
    %v90 = vsel %vm83, %v81, 0.0
    %91 = vadd.xlane.f32.xlu0 %v90
    %v92 = vpop.xlane.xlu0 %91
    %v93 = vsel %vm83, %v82, 0.0
    %94 = vadd.xlane.f32.xlu0 %v93
    %v95 = vpop.xlane.xlu0 %94
    %v96 = vrsqrt.pop %v86
    %v97 = vrsqrt.pop %v89
    %v98 = vrsqrt.pop %v92
    %v99 = vrsqrt.pop %v95
    %v100 = vmul.f32 %v79, %v96
    %v101 = vmul.f32 %v80, %v97
    %v102 = vmul.f32 %v81, %v98
    %v103 = vmul.f32 %v82, %v99
    %v108 = vlaneseq
    %v109 = vshrl.u32 %v108, 7
    %v110 = vsub.s32 %v72, %v109
    %v111 = vrot.slane %v96, %v110
    %v112 = vadd.s32 %v72, 4294967288
    %v113 = vlaneseq
    %v114 = vshrl.u32 %v113, 7
    %v115 = vsub.s32 %v112, %v114
    %v116 = vrot.slane %v97, %v115
    %vm117 = vcmask 130112
    %v118 = vsel %vm117, %v116, %v111
    %v119 = vlaneseq
    %v120 = vshrl.u32 %v119, 7
    %v121 = vsub.s32 %v72, %v120
    %v122 = vrot.slane %v98, %v121
    %v123 = vlaneseq
    %v124 = vshrl.u32 %v123, 7
    %v125 = vsub.s32 %v112, %v124
    %v126 = vrot.slane %v99, %v125
    %v127 = vsel %vm117, %v126, %v122
    %vm128 = vcmask 1042434
    %v129 = vsel %vm128, %v118, %v118
    %vm130 = vcmask 1043459
    %v131 = vsel %vm130, %v118, %v129
    %vm132 = vcmask 1044484
    %v133 = vsel %vm132, %v118, %v131
    %vm134 = vcmask 1045509
    %v135 = vsel %vm134, %v118, %v133
    %vm136 = vcmask 1046534
    %v137 = vsel %vm136, %v118, %v135
    %vm138 = vcmask 1047559
    %v139 = vsel %vm138, %v118, %v137
    %v140 = vsel %vm128, %v127, %v127
    %v141 = vsel %vm130, %v127, %v140
    %v142 = vsel %vm132, %v127, %v141
    %v143 = vsel %vm134, %v127, %v142
    %v144 = vsel %vm136, %v127, %v143
    %v145 = vsel %vm138, %v127, %v144
    %v148 = vmul.f32 %v100, %v139
    %v149 = vmul.f32 %v101, %v139
    %v150 = vmul.f32 %v102, %v145
    %v151 = vmul.f32 %v103, %v145
    %155 = vrot.lane.b32.xlu0 0.0, 16
    %v156 = vpop.permute.xlu0 %155
    %157 = vrot.lane.b32.xlu0 %v150, 16
    %v158 = vpop.permute.xlu0 %157
    %159 = vrot.lane.b32.xlu0 %v151, 16
    %v160 = vpop.permute.xlu0 %159
    %v164 = vsel %vm83, %v148, %v156
    %v165 = vsel %vm83, %v149, %v156
    %v166 = vsel %vm83, 0.0, %v158
    %v167 = vsel %vm83, 0.0, %v160
    %v168 = vpack.c.bf16 %v165, %v164
    %v169 = vpack.c.bf16 %v167, %v166
    %v170 = vld [vmem:[%s1] sm:$0xf]
    %v171 = vld [vmem:[%s1 + $0x4] sm:$0xf]
    %v172 = vld [vmem:[%s1 + $0x8] sm:$0xf]
    %v173 = vld [vmem:[%s1 + $0xc] sm:$0xf]
    %v174 = vld [vmem:[%s2] sm:$0xf]
    %v179 = vunpack.c.l.b16 %v170
    %v180 = vunpack.c.l.b16 %v171
    %v181 = vunpack.c.l.b16 %v172
    %v182 = vunpack.c.l.b16 %v173
    %v183 = vpack.c.b16 %v180, %v179
    %v184 = vpack.c.b16 %v182, %v181
    %vm185 = vcmask 64512
    %v187 = vsel %vm185, %v183, 0
    %v190 = vsel %vm185, %v184, 0
    %vm192 = vcmask 1043456
    %v194 = vsel %vm192, %v174, 0
    %196 = vmatprep.subr.bf16.mxu0 0
    %197 = vmatpush1.bf16.msra.mxu0 0
    %198 = vmatprep.subr.bf16.mxu0 0
    %199 = vmatpush1.bf16.msra.mxu0 0
    %200 = vmatprep.subr.bf16.mxu0 0
    %201 = vmatpush1.bf16.msra.mxu0 0
    %202 = vmatprep.subr.bf16.mxu0 0
    %203 = vmatpush1.bf16.msra.mxu0 0
    %204 = vmatprep.subr.bf16.mxu0 0
    %205 = vmatpush1.bf16.msra.mxu0 0
    %206 = vmatprep.subr.bf16.mxu0 0
    %207 = vmatpush1.bf16.msra.mxu0 0
    %208 = vmatprep.subr.bf16.mxu0 0
    %209 = vmatpush1.bf16.msra.mxu0 0
    %210 = vmatprep.subr.bf16.mxu0 0
    %211 = vmatpush1.bf16.msra.mxu0 %v194
    %212 = vmatprep.subr.bf16.mxu0 0
    %213 = vmatpush2.bf16.msra.mxu0 0
    %214 = vmatprep.subr.bf16.mxu0 0
    %215 = vmatpush2.bf16.msra.mxu0 0
    %216 = vmatprep.subr.bf16.mxu0 0
    %217 = vmatpush2.bf16.msra.mxu0 0
    %218 = vmatprep.subr.bf16.mxu0 0
    %219 = vmatpush2.bf16.msra.mxu0 0
    %220 = vmatprep.subr.bf16.mxu0 0
    %221 = vmatpush2.bf16.msra.mxu0 0
    %222 = vmatprep.subr.bf16.mxu0 0
    %223 = vmatpush2.bf16.msra.mxu0 0
    %224 = vmatprep.subr.bf16.mxu0 0
    %225 = vmatpush2.bf16.msra.mxu0 0
    %226 = vmatprep.subr.bf16.mxu0 0
    %227 = vmatpush2.bf16.msra.mxu0 0
    %228 = vmatprep.mubr.bf16.mxu0 0
    %229 = vmatmul.mubr.bf16.gmra.mxu0 %v187
    %v230 = vpop.f32.mrf.mxu0
    %v231 = vadd.f32 0.0, %v230
    %v232 = vpop.f32.mrf.mxu0
    %v233 = vpop.f32.mrf.mxu0
    %v234 = vadd.f32 0.0, %v233
    %v235 = vpop.f32.mrf.mxu0
    %236 = vmatprep.mubr.bf16.mxu0 0
    %237 = vmatmul.mubr.bf16.gmra.mxu0 %v190
    %v238 = vpop.f32.mrf.mxu0
    %v239 = vadd.f32 0.0, %v238
    %v240 = vpop.f32.mrf.mxu0
    %v241 = vpop.f32.mrf.mxu0
    %v242 = vadd.f32 0.0, %v241
    %v243 = vpop.f32.mrf.mxu0
    %244 = vdwg.mxu0
    %v245 = vld [vmem:[#allocation2] sm:$0xf]
    %v246 = vld [vmem:[#allocation2 + $0x4] sm:$0xf]
    %v247 = vld [vmem:[#allocation2 + $0x8] sm:$0xf]
    %v248 = vld [vmem:[#allocation2 + $0xc] sm:$0xf]
    %v249 = vld [vmem:[#allocation2 + $0x10] sm:$0xf]
    %v250 = vld [vmem:[#allocation2 + $0x14] sm:$0xf]
    %v251 = vld [vmem:[#allocation2 + $0x18] sm:$0xf]
    %v252 = vld [vmem:[#allocation2 + $0x1c] sm:$0xf]
    %v253 = vld [vmem:[#allocation2 + $0x20] sm:$0xf]
    %v254 = vld [vmem:[#allocation2 + $0x24] sm:$0xf]
    %v255 = vld [vmem:[#allocation2 + $0x28] sm:$0xf]
    %v256 = vld [vmem:[#allocation2 + $0x2c] sm:$0xf]
    %v257 = vld [vmem:[#allocation2 + $0x30] sm:$0xf]
    %v258 = vld [vmem:[#allocation2 + $0x34] sm:$0xf]
    %v259 = vld [vmem:[#allocation2 + $0x38] sm:$0xf]
    %v260 = vld [vmem:[#allocation2 + $0x3c] sm:$0xf]
    %v261 = vld [vmem:[%s4] sm:$0x1]
    %v262 = vpack.c.bf16 %v234, %v231
    %v263 = vpack.c.bf16 %v242, %v239
    %v280 = vunpack.c.l.b16 %v245
    %v281 = vunpack.c.l.b16 %v246
    %v282 = vunpack.c.l.b16 %v247
    %v283 = vunpack.c.l.b16 %v248
    %v284 = vunpack.c.l.b16 %v249
    %v285 = vunpack.c.l.b16 %v250
    %v286 = vunpack.c.l.b16 %v251
    %v287 = vunpack.c.l.b16 %v252
    %v288 = vunpack.c.l.b16 %v253
    %v289 = vunpack.c.l.b16 %v254
    %v290 = vunpack.c.l.b16 %v255
    %v291 = vunpack.c.l.b16 %v256
    %v292 = vunpack.c.l.b16 %v257
    %v293 = vunpack.c.l.b16 %v258
    %v294 = vunpack.c.l.b16 %v259
    %v295 = vunpack.c.l.b16 %v260
    %v296 = vpack.c.b16 %v281, %v280
    %v297 = vpack.c.b16 %v283, %v282
    %v298 = vpack.c.b16 %v285, %v284
    %v299 = vpack.c.b16 %v287, %v286
    %v300 = vpack.c.b16 %v289, %v288
    %v301 = vpack.c.b16 %v291, %v290
    %v302 = vpack.c.b16 %v293, %v292
    %v303 = vpack.c.b16 %v295, %v294
    %312 = vmatprep.subr.bf16.mxu0 0
    %313 = vmatpush1.bf16.msra.mxu0 %v303
    %314 = vmatprep.subr.bf16.mxu0 0
    %315 = vmatpush1.bf16.msra.mxu0 %v302
    %316 = vmatprep.subr.bf16.mxu0 0
    %317 = vmatpush1.bf16.msra.mxu0 %v301
    %318 = vmatprep.subr.bf16.mxu0 0
    %319 = vmatpush1.bf16.msra.mxu0 %v300
    %320 = vmatprep.subr.bf16.mxu0 0
    %321 = vmatpush1.bf16.msra.mxu0 %v299
    %322 = vmatprep.subr.bf16.mxu0 0
    %323 = vmatpush1.bf16.msra.mxu0 %v298
    %324 = vmatprep.subr.bf16.mxu0 0
    %325 = vmatpush1.bf16.msra.mxu0 %v297
    %326 = vmatprep.subr.bf16.mxu0 0
    %327 = vmatpush1.bf16.msra.mxu0 %v296
    %328 = vmatprep.subr.bf16.mxu0 0
    %329 = vmatpush2.bf16.msra.mxu0 0
    %330 = vmatprep.subr.bf16.mxu0 0
    %331 = vmatpush2.bf16.msra.mxu0 0
    %332 = vmatprep.subr.bf16.mxu0 0
    %333 = vmatpush2.bf16.msra.mxu0 0
    %334 = vmatprep.subr.bf16.mxu0 0
    %335 = vmatpush2.bf16.msra.mxu0 0
    %336 = vmatprep.subr.bf16.mxu0 0
    %337 = vmatpush2.bf16.msra.mxu0 0
    %338 = vmatprep.subr.bf16.mxu0 0
    %339 = vmatpush2.bf16.msra.mxu0 0
    %340 = vmatprep.subr.bf16.mxu0 0
    %341 = vmatpush2.bf16.msra.mxu0 0
    %342 = vmatprep.subr.bf16.mxu0 0
    %343 = vmatpush2.bf16.msra.mxu0 0
    %344 = vmatprep.mubr.bf16.mxu0 0
    %345 = vmatmul.mubr.bf16.gmra.mxu0 %v262
    %v346 = vpop.f32.mrf.mxu0
    %v347 = vadd.f32 0.0, %v346
    %v348 = vpop.f32.mrf.mxu0
    %v349 = vpop.f32.mrf.mxu0
    %v350 = vadd.f32 0.0, %v349
    %v351 = vpop.f32.mrf.mxu0
    %352 = vmatprep.mubr.bf16.mxu0 0
    %353 = vmatmul.mubr.bf16.gmra.mxu0 %v263
    %v354 = vpop.f32.mrf.mxu0
    %v355 = vadd.f32 0.0, %v354
    %v356 = vpop.f32.mrf.mxu0
    %v357 = vpop.f32.mrf.mxu0
    %v358 = vadd.f32 0.0, %v357
    %v359 = vpop.f32.mrf.mxu0
    %360 = vdwg.mxu0
    %v361 = vpack.c.bf16 %v350, %v347
    %v362 = vpack.c.bf16 %v358, %v355
    %v364 = vlaneseq
    %v365 = vshrl.u32 %v364, 7
    %v366 = vsub.s32 0, %v365
    %v367 = vrot.slane %v261, %v366
    %vm369 = vcmask 261120
    %v371 = vsel %vm369, %v168, 0
    %v374 = vsel %vm369, %v169, 0
    %376 = vmatprep.subr.bf16.mxu0 0
    %377 = vmatpush1.bf16.msra.mxu0 0
    %378 = vmatprep.subr.bf16.mxu0 0
    %379 = vmatpush1.bf16.msra.mxu0 0
    %380 = vmatprep.subr.bf16.mxu0 0
    %381 = vmatpush1.bf16.msra.mxu0 0
    %382 = vmatprep.subr.bf16.mxu0 0
    %383 = vmatpush1.bf16.msra.mxu0 0
    %384 = vmatprep.subr.bf16.mxu0 0
    %385 = vmatpush1.bf16.msra.mxu0 0
    %386 = vmatprep.subr.bf16.mxu0 0
    %387 = vmatpush1.bf16.msra.mxu0 0
    %388 = vmatprep.subr.bf16.mxu0 0
    %389 = vmatpush1.bf16.msra.mxu0 %v362
    %390 = vmatprep.subr.bf16.mxu0 0
    %391 = vmatpush1.bf16.msra.mxu0 %v361
    %392 = vmatprep.subr.bf16.mxu0 0
    %393 = vmatpush2.bf16.msra.mxu0 0
    %394 = vmatprep.subr.bf16.mxu0 0
    %395 = vmatpush2.bf16.msra.mxu0 0
    %396 = vmatprep.subr.bf16.mxu0 0
    %397 = vmatpush2.bf16.msra.mxu0 0
    %398 = vmatprep.subr.bf16.mxu0 0
    %399 = vmatpush2.bf16.msra.mxu0 0
    %400 = vmatprep.subr.bf16.mxu0 0
    %401 = vmatpush2.bf16.msra.mxu0 0
    %402 = vmatprep.subr.bf16.mxu0 0
    %403 = vmatpush2.bf16.msra.mxu0 0
    %404 = vmatprep.subr.bf16.mxu0 0
    %405 = vmatpush2.bf16.msra.mxu0 0
    %406 = vmatprep.subr.bf16.mxu0 0
    %407 = vmatpush2.bf16.msra.mxu0 0
    %408 = vmatprep.mubr.bf16.mxu0 0
    %409 = vmatmul.mubr.bf16.gmra.mxu0 %v371
    %v410 = vpop.f32.mrf.mxu0
    %v411 = vadd.f32 %v367, %v410
    %v412 = vpop.f32.mrf.mxu0
    %v413 = vpop.f32.mrf.mxu0
    %v414 = vadd.f32 %v367, %v413
    %v415 = vpop.f32.mrf.mxu0
    %416 = vmatprep.mubr.bf16.mxu0 0
    %417 = vmatmul.mubr.bf16.gmra.mxu0 %v374
    %v418 = vpop.f32.mrf.mxu0
    %v419 = vadd.f32 %v367, %v418
    %v420 = vpop.f32.mrf.mxu0
    %v421 = vpop.f32.mrf.mxu0
    %v422 = vadd.f32 %v367, %v421
    %v423 = vpop.f32.mrf.mxu0
    %424 = vdwg.mxu0
    %v425 = vmax.f32 %v411, 0.0
    %v426 = vmax.f32 %v414, 0.0
    %v427 = vmax.f32 %v419, 0.0
    %v428 = vmax.f32 %v422, 0.0
    %v429 = vld [vmem:[#allocation5] sm:$0xf]
    %v430 = vld [vmem:[#allocation5 + $0x4] sm:$0xf]
    %v431 = vld [vmem:[#allocation5 + $0x8] sm:$0xf]
    %v432 = vld [vmem:[#allocation5 + $0xc] sm:$0xf]
    %v433 = vld [vmem:[#allocation5 + $0x10] sm:$0xf]
    %v434 = vld [vmem:[#allocation5 + $0x14] sm:$0xf]
    %v435 = vld [vmem:[#allocation5 + $0x18] sm:$0xf]
    %v436 = vld [vmem:[#allocation5 + $0x1c] sm:$0xf]
    %v437 = vld [vmem:[#allocation5 + $0x20] sm:$0xf]
    %v438 = vld [vmem:[#allocation5 + $0x24] sm:$0xf]
    %v439 = vld [vmem:[#allocation5 + $0x28] sm:$0xf]
    %v440 = vld [vmem:[#allocation5 + $0x2c] sm:$0xf]
    %v441 = vld [vmem:[#allocation5 + $0x30] sm:$0xf]
    %v442 = vld [vmem:[#allocation5 + $0x34] sm:$0xf]
    %v443 = vld [vmem:[#allocation5 + $0x38] sm:$0xf]
    %v444 = vld [vmem:[#allocation5 + $0x3c] sm:$0xf]
    %v445 = vld [vmem:[%s6] sm:$0x1]
    %v446 = vpack.c.bf16 %v426, %v425
    %v447 = vpack.c.bf16 %v428, %v427
    %v464 = vunpack.c.l.b16 %v429
    %v465 = vunpack.c.l.b16 %v430
    %v466 = vunpack.c.l.b16 %v431
    %v467 = vunpack.c.l.b16 %v432
    %v468 = vunpack.c.l.b16 %v433
    %v469 = vunpack.c.l.b16 %v434
    %v470 = vunpack.c.l.b16 %v435
    %v471 = vunpack.c.l.b16 %v436
    %v472 = vunpack.c.l.b16 %v437
    %v473 = vunpack.c.l.b16 %v438
    %v474 = vunpack.c.l.b16 %v439
    %v475 = vunpack.c.l.b16 %v440
    %v476 = vunpack.c.l.b16 %v441
    %v477 = vunpack.c.l.b16 %v442
    %v478 = vunpack.c.l.b16 %v443
    %v479 = vunpack.c.l.b16 %v444
    %v480 = vpack.c.b16 %v465, %v464
    %v481 = vpack.c.b16 %v467, %v466
    %v482 = vpack.c.b16 %v469, %v468
    %v483 = vpack.c.b16 %v471, %v470
    %v484 = vpack.c.b16 %v473, %v472
    %v485 = vpack.c.b16 %v475, %v474
    %v486 = vpack.c.b16 %v477, %v476
    %v487 = vpack.c.b16 %v479, %v478
    %496 = vmatprep.subr.bf16.mxu0 0
    %497 = vmatpush1.bf16.msra.mxu0 %v487
    %498 = vmatprep.subr.bf16.mxu0 0
    %499 = vmatpush1.bf16.msra.mxu0 %v486
    %500 = vmatprep.subr.bf16.mxu0 0
    %501 = vmatpush1.bf16.msra.mxu0 %v485
    %502 = vmatprep.subr.bf16.mxu0 0
    %503 = vmatpush1.bf16.msra.mxu0 %v484
    %504 = vmatprep.subr.bf16.mxu0 0
    %505 = vmatpush1.bf16.msra.mxu0 %v483
    %506 = vmatprep.subr.bf16.mxu0 0
    %507 = vmatpush1.bf16.msra.mxu0 %v482
    %508 = vmatprep.subr.bf16.mxu0 0
    %509 = vmatpush1.bf16.msra.mxu0 %v481
    %510 = vmatprep.subr.bf16.mxu0 0
    %511 = vmatpush1.bf16.msra.mxu0 %v480
    %512 = vmatprep.subr.bf16.mxu0 0
    %513 = vmatpush2.bf16.msra.mxu0 0
    %514 = vmatprep.subr.bf16.mxu0 0
    %515 = vmatpush2.bf16.msra.mxu0 0
    %516 = vmatprep.subr.bf16.mxu0 0
    %517 = vmatpush2.bf16.msra.mxu0 0
    %518 = vmatprep.subr.bf16.mxu0 0
    %519 = vmatpush2.bf16.msra.mxu0 0
    %520 = vmatprep.subr.bf16.mxu0 0
    %521 = vmatpush2.bf16.msra.mxu0 0
    %522 = vmatprep.subr.bf16.mxu0 0
    %523 = vmatpush2.bf16.msra.mxu0 0
    %524 = vmatprep.subr.bf16.mxu0 0
    %525 = vmatpush2.bf16.msra.mxu0 0
    %526 = vmatprep.subr.bf16.mxu0 0
    %527 = vmatpush2.bf16.msra.mxu0 0
    %528 = vmatprep.mubr.bf16.mxu0 0
    %529 = vmatmul.mubr.bf16.gmra.mxu0 %v446
    %v530 = vpop.f32.mrf.mxu0
    %v531 = vadd.f32 0.0, %v530
    %v532 = vpop.f32.mrf.mxu0
    %v533 = vpop.f32.mrf.mxu0
    %v534 = vadd.f32 0.0, %v533
    %v535 = vpop.f32.mrf.mxu0
    %536 = vmatprep.mubr.bf16.mxu0 0
    %537 = vmatmul.mubr.bf16.gmra.mxu0 %v447
    %v538 = vpop.f32.mrf.mxu0
    %v539 = vadd.f32 0.0, %v538
    %v540 = vpop.f32.mrf.mxu0
    %v541 = vpop.f32.mrf.mxu0
    %v542 = vadd.f32 0.0, %v541
    %v543 = vpop.f32.mrf.mxu0
    %544 = vdwg.mxu0
    %v545 = vpack.c.bf16 %v534, %v531
    %v546 = vpack.c.bf16 %v542, %v539
    %v548 = vlaneseq
    %v549 = vshrl.u32 %v548, 7
    %v550 = vsub.s32 0, %v549
    %v551 = vrot.slane %v445, %v550
    %553 = vmatprep.subr.bf16.mxu0 0
    %554 = vmatpush1.bf16.msra.mxu0 0
    %555 = vmatprep.subr.bf16.mxu0 0
    %556 = vmatpush1.bf16.msra.mxu0 0
    %557 = vmatprep.subr.bf16.mxu0 0
    %558 = vmatpush1.bf16.msra.mxu0 0
    %559 = vmatprep.subr.bf16.mxu0 0
    %560 = vmatpush1.bf16.msra.mxu0 0
    %561 = vmatprep.subr.bf16.mxu0 0
    %562 = vmatpush1.bf16.msra.mxu0 0
    %563 = vmatprep.subr.bf16.mxu0 0
    %564 = vmatpush1.bf16.msra.mxu0 0
    %565 = vmatprep.subr.bf16.mxu0 0
    %566 = vmatpush1.bf16.msra.mxu0 %v546
    %567 = vmatprep.subr.bf16.mxu0 0
    %568 = vmatpush1.bf16.msra.mxu0 %v545
    %569 = vmatprep.subr.bf16.mxu0 0
    %570 = vmatpush2.bf16.msra.mxu0 0
    %571 = vmatprep.subr.bf16.mxu0 0
    %572 = vmatpush2.bf16.msra.mxu0 0
    %573 = vmatprep.subr.bf16.mxu0 0
    %574 = vmatpush2.bf16.msra.mxu0 0
    %575 = vmatprep.subr.bf16.mxu0 0
    %576 = vmatpush2.bf16.msra.mxu0 0
    %577 = vmatprep.subr.bf16.mxu0 0
    %578 = vmatpush2.bf16.msra.mxu0 0
    %579 = vmatprep.subr.bf16.mxu0 0
    %580 = vmatpush2.bf16.msra.mxu0 0
    %581 = vmatprep.subr.bf16.mxu0 0
    %582 = vmatpush2.bf16.msra.mxu0 0
    %583 = vmatprep.subr.bf16.mxu0 0
    %584 = vmatpush2.bf16.msra.mxu0 0
    %585 = vmatprep.mubr.bf16.mxu0 0
    %586 = vmatmul.mubr.bf16.gmra.mxu0 %v371
    %v587 = vpop.f32.mrf.mxu0
    %v588 = vadd.f32 %v551, %v587
    %v589 = vpop.f32.mrf.mxu0
    %v590 = vpop.f32.mrf.mxu0
    %v591 = vadd.f32 %v551, %v590
    %v592 = vpop.f32.mrf.mxu0
    %593 = vmatprep.mubr.bf16.mxu0 0
    %594 = vmatmul.mubr.bf16.gmra.mxu0 %v374
    %v595 = vpop.f32.mrf.mxu0
    %v596 = vadd.f32 %v551, %v595
    %v597 = vpop.f32.mrf.mxu0
    %v598 = vpop.f32.mrf.mxu0
    %v599 = vadd.f32 %v551, %v598
    %v600 = vpop.f32.mrf.mxu0
    %601 = vdwg.mxu0
    %v602 = vmax.f32 %v588, 0.0
    %v603 = vmax.f32 %v591, 0.0
    %v604 = vmax.f32 %v596, 0.0
    %v605 = vmax.f32 %v599, 0.0
    %v606 = vpack.c.bf16 %v603, %v602
    %v607 = vpack.c.bf16 %v605, %v604
    %v610 = vunpack.c.l.b16 %v606
    %v611 = vunpack.c.h.b16 %v606
    %v612 = vunpack.c.l.b16 %v607
    %v613 = vunpack.c.h.b16 %v607
    %v614 = vpack.c.b16 %v610, %v610
    %v615 = vpack.c.b16 %v611, %v611
    %v616 = vpack.c.b16 %v612, %v612
    %v617 = vpack.c.b16 %v613, %v613
    %622 = vst [vmem:[#allocation7] sm:$0xf] %v614
    %623 = vst [vmem:[#allocation7 + $0x4] sm:$0xf] %v615
    %624 = vst [vmem:[#allocation7 + $0x8] sm:$0xf] %v616
    %625 = vst [vmem:[#allocation7 + $0xc] sm:$0xf] %v617
    // Predicated region
    $region38: #{tpu_custom_call.1} parent=1 // pred_check
      _
    $region39: #{tpu_custom_call.1} parent=1 // pred_check_branch
      %627 = sbr.rel (0) target = $region41
    $region40: #{tpu_custom_call.1} parent=1 // pred_region
      %s629 = ssub.s32 256, 256
      %630 = vsyncadd [#allocation4], %s629
      %s631 = sshll.u32 [#allocation7], 4
      %s632 = int_to_ptr.vmem [resolvable:$true] %s631
      %637 = dma.vmem_to_hbm [thread:$0]  %s632, 256, %s7, [#allocation4], 64, 64, 4
    $region41: #{tpu_custom_call.1} parent=1 // pred_fallthru
      _
    // Predicated region
    $region42: #{tpu_custom_call.1} parent=1 // pred_check
      _
    $region43: #{tpu_custom_call.1} parent=1 // pred_check_branch
      %639 = sbr.rel (0) target = $region45
    $region44: #{tpu_custom_call.1} parent=1 // pred_region
      %640 = dma.done [#allocation4], 256
    $region45: #{tpu_custom_call.1} parent=1 // pred_fallthru
      _
    %641 = vsyncpa [#allocation3], 1
    %642 = vsyncpa [#allocation6], 1
    %643 = vsyncpa [#allocation4], 1

</llo_original>
